<compile_context>
chip_gen: v7x
topology: tpu7x:2x2x1
jax: 0.10.0
libtpu: 0.0.40
codegen_flags: <defaults>
</compile_context>

<pallas_src>
import math
from functools import partial

import jax
import jax.numpy as jnp
from jax import lax
from jax.experimental import pallas as pl
from jax.experimental.pallas import tpu as pltpu


def _round_up(x, m):
    return ((x + m - 1) // m) * m


def _pick_tile(batch, tile_b):
    """Batch tile: multiple of 128 lanes, >=512 when possible, and small
    enough that large batches get a multi-step grid (pipelining / 2-TC)."""
    b_ru = _round_up(batch, 128)
    t = max(128, (int(tile_b) // 128) * 128)
    t = min(t, b_ru)
    if b_ru >= 4 * 512:                       # enough work for >=4 grid steps
        quarter = max(512, (b_ru // 4 // 128) * 128)
        t = min(t, quarter)
    return t


def _make_lyapunov_kernel(n_mid, feats, lam, compute_dtype):
    """Kernel for an MLP with `n_mid` hidden->hidden layers, batch on lanes."""

    def kernel(z_ref, w_aug_ref, bias_ref, *rest):
        # rest = (w_mid_0, ..., w_mid_{n_mid-1}, w_out_ref, out_ref)
        w_mid_refs = rest[:n_mid]
        w_out_ref = rest[n_mid]
        out_ref = rest[n_mid + 1]

        # First (augmented) layer, f32 on the MXU, contracting the minor dims
        # of both operands ("nt" form) so z never needs an explicit transpose:
        #   pre = W_aug @ z^T + bias,
        #   W_aug = [[W_in], [I_2]],  bias = [[-W_in z_eq], [-z_eq]]
        # rows [0:F)   -> first-layer pre-activation          (F, tile)
        # rows [F:F+2) -> z0^T = (z - z_eq)^T (exact)         (2, tile)
        pre = lax.dot_general(
            w_aug_ref[...], z_ref[...],
            dimension_numbers=(((1,), (1,)), ((), ())),
            preferred_element_type=jnp.float32,
        ) + bias_ref[...]

        z0t = pre[feats:feats + 2, :]                              # (2, tile)
        norm2 = z0t[0:1, :] * z0t[0:1, :] + z0t[1:2, :] * z0t[1:2, :]  # (1, tile)

        # Activation chain, batch on lanes.  bf16 weights/activations feed the
        # MXU with f32 accumulation; tanh runs on the f32 accumulator (EUP).
        h = jnp.tanh(pre[0:feats, :]).astype(compute_dtype)       # (F, tile)
        for w_ref in w_mid_refs:
            h = jnp.tanh(
                jnp.dot(w_ref[...], h, preferred_element_type=jnp.float32)
            ).astype(compute_dtype)
        y = jnp.dot(w_out_ref[...], h, preferred_element_type=jnp.float32)  # (1, tile)

        out_ref[...] = y * y + lam * norm2

    return kernel


@partial(jax.jit, static_argnames=("lam", "tile_b", "compute_dtype"))
def lyapunov_general_forward(z, z_eq, w_in, w_mids, w_out,
                             lam=0.1, tile_b=1024, compute_dtype=jnp.float32):
    """Pallas TPU implementation of LyapunovGeneral.forward.

    z      : (B, 2) float32           -- native layout, no wrapper transpose/pad
    z_eq   : (2,)   float32
    w_in   : (F, 2)  PyTorch-layout Linear weight (out, in)
    w_mids : list of (F, F) PyTorch-layout weights
    w_out  : (1, F)  PyTorch-layout weight
    lam    : coefficient (static)
    tile_b : batch tile hint (static)
    compute_dtype : jnp.float32 (exact, v5e) or jnp.bfloat16 (v6e/v7x recipe)

    Returns (B,) float32 (torch `.squeeze()` of the (B, 1) result).
    """
    z = jnp.asarray(z, jnp.float32)
    B = z.shape[0]
    F = w_in.shape[0]
    n_mid = len(w_mids)
    cdt = compute_dtype

    tile = _pick_tile(B, tile_b)

    # Fold z_eq into an affine first layer and append identity rows so one MXU
    # pass emits both the layer-1 pre-activation and z0^T (for the norm term).
    w_in = jnp.asarray(w_in, jnp.float32)
    w_aug = jnp.concatenate([w_in, jnp.eye(2, dtype=jnp.float32)], axis=0)  # (F+2, 2)
    z_eq = jnp.asarray(z_eq, jnp.float32).reshape(2)
    bias = -(w_aug @ z_eq).reshape(F + 2, 1)                                # (F+2, 1)

    w_mids_c = [jnp.asarray(w, cdt) for w in w_mids]                        # (F, F)
    w_out_c = jnp.asarray(w_out, cdt)                                       # (1, F)

    # Tiny batches: pad once (negligible) so the single block is never larger
    # than the array.  Large batches: no padding pass; the (at most one)
    # partial tail block is handled by Pallas (all ops are lane-local, so
    # garbage tail lanes never touch valid lanes and are masked on store).
    if B < tile:
        z_in = jnp.pad(z, ((0, tile - B), (0, 0)))
        Bk = tile
    else:
        z_in, Bk = z, B

    grid = (pl.cdiv(Bk, tile),)
    const = lambda i: (0, 0)   # weights / bias stay VMEM-resident across steps

    in_specs = [
        pl.BlockSpec((tile, 2), lambda i: (i, 0)),     # z, native (B, 2) layout
        pl.BlockSpec((F + 2, 2), const),               # augmented first-layer W
        pl.BlockSpec((F + 2, 1), const),               # folded z_eq bias
    ]
    in_specs += [pl.BlockSpec((F, F), const) for _ in range(n_mid)]
    in_specs += [pl.BlockSpec((1, F), const)]          # w_out

    itemsize = jnp.dtype(cdt).itemsize
    cost = pl.CostEstimate(
        flops=int(2 * Bk * ((F + 2) * 2 + n_mid * F * F + F) + 6 * Bk),
        transcendentals=int((n_mid + 1) * F * Bk),
        bytes_accessed=int(12 * Bk + 4 * ((F + 2) * 3) + itemsize * (n_mid * F * F + F)),
    )

    out = pl.pallas_call(
        _make_lyapunov_kernel(n_mid, F, float(lam), cdt),
        out_shape=jax.ShapeDtypeStruct((1, Bk), jnp.float32),
        grid=grid,
        in_specs=in_specs,
        out_specs=pl.BlockSpec((1, tile), lambda i: (0, i)),   # lane-dense output
        compiler_params=pltpu.CompilerParams(
            dimension_semantics=("parallel",),                 # 2-TC shard on v7x
        ),
        cost_estimate=cost,
    )(z_in, w_aug, bias, *w_mids_c, w_out_c)

    return out[0, :B]   # drop any tiny-batch padding + torch .squeeze()


def _torch_linear_init(key, out_features, in_features):
    """Deterministic init matching nn.Linear default: U(-1/sqrt(in), 1/sqrt(in))."""
    bound = 1.0 / math.sqrt(in_features)
    return jax.random.uniform(
        key, (out_features, in_features), jnp.float32, minval=-bound, maxval=bound
    )


def _reference_forward(z, z_eq, w_in, w_mids, w_out, lam=0.1):
    """Pure-JAX reference mirroring the PyTorch module."""
    z0 = z - z_eq[None, :]
    h = jnp.tanh(z0 @ w_in.T)
    for w in w_mids:
        h = jnp.tanh(h @ w.T)
    y = h @ w_out.T                                   # (B, 1)
    v = y ** 2 + lam * jnp.sum(z0 ** 2, axis=1, keepdims=True)
    return jnp.squeeze(v)


if __name__ == "__main__":
    # Shapes consistent with the module: state dim 2, hidden features 32.
    n_layers = 3     # -> 1 hidden->hidden layer
    features = 32

    root = jax.random.PRNGKey(0)
    k_z1, k_z2, k_z3, k_z4, k_w0, k_w1, k_w2 = jax.random.split(root, 7)

    z_eq = jnp.array([math.pi, 0.0], jnp.float32)
    w_in = _torch_linear_init(k_w0, features, 2)             # Linear(2, F, bias=False)
    w_mids = [_torch_linear_init(k_w1, features, features)]  # Linear(F, F, bias=False)
    w_out = _torch_linear_init(k_w2, 1, features)            # Linear(F, 1, bias=False)

    # Case 1: tiny batch (single padded tile), f32 path.
    z1 = jax.random.normal(k_z1, (8, 2), jnp.float32)
    v1 = jax.block_until_ready(lyapunov_general_forward(z1, z_eq, w_in, w_mids, w_out))
    r1 = _reference_forward(z1, z_eq, w_in, w_mids, w_out)
    assert v1.shape == (8,)
    assert jnp.allclose(v1, r1, atol=1e-4, rtol=1e-4)

    # Case 2: batch not a multiple of 128 (padded single tile), f32 path.
    z2 = jax.random.normal(k_z2, (300, 2), jnp.float32)
    v2 = jax.block_until_ready(lyapunov_general_forward(z2, z_eq, w_in, w_mids, w_out))
    r2 = _reference_forward(z2, z_eq, w_in, w_mids, w_out)
    assert v2.shape == (300,)
    assert jnp.allclose(v2, r2, atol=1e-4, rtol=1e-4)

    # Case 3: multi-step grid with a partial tail block (no wrapper pad), f32.
    z3 = jax.random.normal(k_z3, (2500, 2), jnp.float32)
    v3 = jax.block_until_ready(lyapunov_general_forward(z3, z_eq, w_in, w_mids, w_out))
    r3 = _reference_forward(z3, z_eq, w_in, w_mids, w_out)
    assert v3.shape == (2500,)
    assert jnp.allclose(v3, r3, atol=1e-4, rtol=1e-4)

    # Case 4: multi-step grid, bf16 compute path (v6e/v7x recipe), looser tol.
    z4 = jax.random.normal(k_z4, (4096, 2), jnp.float32)
    v4 = jax.block_until_ready(
        lyapunov_general_forward(z4, z_eq, w_in, w_mids, w_out,
                                 compute_dtype=jnp.bfloat16))
    r4 = _reference_forward(z4, z_eq, w_in, w_mids, w_out)
    assert v4.shape == (4096,)
    assert jnp.allclose(v4, r4, atol=5e-2, rtol=5e-2)

    print("KERNEL_OK")
</pallas_src>

<mosaic_0001>
module attributes {stable_mosaic.version = 11 : i64} {
  func.func @kernel(%arg0: i32, %arg1: memref<128x2xf32, #tpu.memory_space<vmem>>, %arg2: memref<34x2xf32, #tpu.memory_space<vmem>>, %arg3: memref<34x1xf32, #tpu.memory_space<vmem>>, %arg4: memref<32x32xf32, #tpu.memory_space<vmem>>, %arg5: memref<1x32xf32, #tpu.memory_space<vmem>>, %arg6: memref<1x128xf32, #tpu.memory_space<vmem>>) attributes {dimension_semantics = [#tpu.dimension_semantics<parallel>], iteration_bounds = array<i64: 1>, scalar_prefetch = 0 : i64, scratch_operands = 0 : i64, tpu.core_type = #tpu.core_type<tc>, window_params = [{transform_indices = @transform_0, window_bounds = array<i64: 128, 2>}, {pipeline_mode = #tpu.pipeline_mode<synchronous>, transform_indices = @transform_1, window_bounds = array<i64: 34, 2>}, {pipeline_mode = #tpu.pipeline_mode<synchronous>, transform_indices = @transform_2, window_bounds = array<i64: 34, 1>}, {pipeline_mode = #tpu.pipeline_mode<synchronous>, transform_indices = @transform_3, window_bounds = array<i64: 32, 32>}, {pipeline_mode = #tpu.pipeline_mode<synchronous>, transform_indices = @transform_4, window_bounds = array<i64: 1, 32>}, {transform_indices = @transform_5, window_bounds = array<i64: 1, 128>}]} {
    %c0 = arith.constant 0 : index
    %c0_0 = arith.constant 0 : index
    %0 = vector.load %arg2[%c0, %c0_0] : memref<34x2xf32, #tpu.memory_space<vmem>>, vector<34x2xf32>
    %c0_1 = arith.constant 0 : index
    %c0_2 = arith.constant 0 : index
    %1 = vector.load %arg1[%c0_1, %c0_2] : memref<128x2xf32, #tpu.memory_space<vmem>>, vector<128x2xf32>
    %cst = arith.constant dense<0.000000e+00> : vector<34x128xf32>
    %2 = tpu.matmul %0, %1, %cst {dimension_numbers = #tpu.dot_dimension_numbers<[1], [1], [0], [0], [0, 0, 1, 0], [], []>} : vector<34x2xf32>, vector<128x2xf32>, vector<34x128xf32> -> vector<34x128xf32>
    %c0_3 = arith.constant 0 : index
    %c0_4 = arith.constant 0 : index
    %3 = vector.load %arg3[%c0_3, %c0_4] : memref<34x1xf32, #tpu.memory_space<vmem>>, vector<34x1xf32>
    %4 = vector.broadcast %3 : vector<34x1xf32> to vector<34x128xf32>
    %5 = arith.addf %2, %4 : vector<34x128xf32>
    %6 = vector.extract_strided_slice %5 {offsets = [32, 0], sizes = [2, 128], strides = [1, 1]} : vector<34x128xf32> to vector<2x128xf32>
    %7 = vector.extract_strided_slice %6 {offsets = [0, 0], sizes = [1, 128], strides = [1, 1]} : vector<2x128xf32> to vector<1x128xf32>
    %8 = vector.extract_strided_slice %6 {offsets = [0, 0], sizes = [1, 128], strides = [1, 1]} : vector<2x128xf32> to vector<1x128xf32>
    %9 = arith.mulf %7, %8 : vector<1x128xf32>
    %10 = vector.extract_strided_slice %6 {offsets = [1, 0], sizes = [1, 128], strides = [1, 1]} : vector<2x128xf32> to vector<1x128xf32>
    %11 = vector.extract_strided_slice %6 {offsets = [1, 0], sizes = [1, 128], strides = [1, 1]} : vector<2x128xf32> to vector<1x128xf32>
    %12 = arith.mulf %10, %11 : vector<1x128xf32>
    %13 = arith.addf %9, %12 : vector<1x128xf32>
    %14 = vector.extract_strided_slice %5 {offsets = [0, 0], sizes = [32, 128], strides = [1, 1]} : vector<34x128xf32> to vector<32x128xf32>
    %15 = math.tanh %14 : vector<32x128xf32>
    %c0_5 = arith.constant 0 : index
    %c0_6 = arith.constant 0 : index
    %16 = vector.load %arg4[%c0_5, %c0_6] : memref<32x32xf32, #tpu.memory_space<vmem>>, vector<32x32xf32>
    %cst_7 = arith.constant dense<0.000000e+00> : vector<32x128xf32>
    %17 = tpu.matmul %16, %15, %cst_7 {dimension_numbers = #tpu.dot_dimension_numbers<[1], [0], [0], [1], [0, 0, 1, 1], [], []>} : vector<32x32xf32>, vector<32x128xf32>, vector<32x128xf32> -> vector<32x128xf32>
    %18 = math.tanh %17 : vector<32x128xf32>
    %c0_8 = arith.constant 0 : index
    %c0_9 = arith.constant 0 : index
    %19 = vector.load %arg5[%c0_8, %c0_9] : memref<1x32xf32, #tpu.memory_space<vmem>>, vector<1x32xf32>
    %cst_10 = arith.constant dense<0.000000e+00> : vector<1x128xf32>
    %20 = tpu.matmul %19, %18, %cst_10 {dimension_numbers = #tpu.dot_dimension_numbers<[1], [0], [0], [1], [0, 0, 1, 1], [], []>} : vector<1x32xf32>, vector<32x128xf32>, vector<1x128xf32> -> vector<1x128xf32>
    %21 = arith.mulf %20, %20 : vector<1x128xf32>
    %cst_11 = arith.constant 1.000000e-01 : f32
    %22 = vector.broadcast %cst_11 : f32 to vector<1x128xf32>
    %23 = arith.mulf %22, %13 : vector<1x128xf32>
    %24 = arith.addf %21, %23 : vector<1x128xf32>
    %c0_12 = arith.constant 0 : index
    %c0_13 = arith.constant 0 : index
    %25 = vector.load %arg6[%c0_12, %c0_13] : memref<1x128xf32, #tpu.memory_space<vmem>>, vector<1x128xf32>
    tpu.vector_store %arg6[%c0_12, %c0_13], %24 {strides = array<i32>} : memref<1x128xf32, #tpu.memory_space<vmem>>, vector<1x128xf32>,
    return
  }
  func.func @transform_0(%arg0: i32) -> (i32, i32) {
    %c0_i32 = arith.constant 0 : i32
    %c0_i32_0 = arith.constant 0 : i32
    return %arg0, %c0_i32 : i32, i32
  }
  func.func @transform_1(%arg0: i32) -> (i32, i32) {
    %c0_i32 = arith.constant 0 : i32
    %c0_i32_0 = arith.constant 0 : i32
    %c0_i32_1 = arith.constant 0 : i32
    return %c0_i32, %c0_i32_0 : i32, i32
  }
  func.func @transform_2(%arg0: i32) -> (i32, i32) {
    %c0_i32 = arith.constant 0 : i32
    %c0_i32_0 = arith.constant 0 : i32
    %c0_i32_1 = arith.constant 0 : i32
    return %c0_i32, %c0_i32_0 : i32, i32
  }
  func.func @transform_3(%arg0: i32) -> (i32, i32) {
    %c0_i32 = arith.constant 0 : i32
    %c0_i32_0 = arith.constant 0 : i32
    %c0_i32_1 = arith.constant 0 : i32
    return %c0_i32, %c0_i32_0 : i32, i32
  }
  func.func @transform_4(%arg0: i32) -> (i32, i32) {
    %c0_i32 = arith.constant 0 : i32
    %c0_i32_0 = arith.constant 0 : i32
    %c0_i32_1 = arith.constant 0 : i32
    return %c0_i32, %c0_i32_0 : i32, i32
  }
  func.func @transform_5(%arg0: i32) -> (i32, i32) {
    %c0_i32 = arith.constant 0 : i32
    %c0_i32_0 = arith.constant 0 : i32
    return %c0_i32, %arg0 : i32, i32
  }
}

</mosaic_0001>

<llo_original>
// kernel: lyapunov_general_forward.1
$region0: #{lyapunov_general_forward.1}
  #allocation0 [shape = 'u32[]', space=smem, size = 0x4, offset = 0x4, fixed_abs, tag = 'smem constant byte address 0x4 - core index']
  #allocation1 [shape = 'u32[144,128]{1,0:T(1,128)}', space=vmem, size = 0x12000, scoped, tag = 'internal scratch']
  %s0 = inlined_call_operand.vmem [shape: f32[128,2], index: 0, kind: input, shape index: {}]
  %s1 = inlined_call_operand.vmem [shape: f32[34,2], index: 1, kind: input, shape index: {}]
  %s2 = inlined_call_operand.vmem [shape: f32[34,1], index: 2, kind: input, shape index: {}]
  %s3 = inlined_call_operand.vmem [shape: f32[32,32], index: 3, kind: input, shape index: {}]
  %s4 = inlined_call_operand.vmem [shape: f32[1,32], index: 4, kind: input, shape index: {}]
  %s5 = inlined_call_operand.vmem [shape: f32[1,128], index: 5, kind: output, shape index: {}]
  %s6 = sld [smem:[#allocation0]]
  $region30: #{lyapunov_general_forward.1} parent=0
    _
  %s8 = ssub.s32 1, %s6
  %s9 = scalar_select 0, %s8, %s6
  // Predicated region
  $region2: #{lyapunov_general_forward.1} parent=0 // pred_check
    _
  $region3: #{lyapunov_general_forward.1} parent=0 // pred_check_branch
    %11 = sbr.rel (0) target = $region5
  $region4: #{lyapunov_general_forward.1} parent=0 // pred_region
    _
  $region5: #{lyapunov_general_forward.1} parent=0 // pred_fallthru
    _
  // Predicated region
  $region6: #{lyapunov_general_forward.1} parent=0 // pred_check
    _
  $region7: #{lyapunov_general_forward.1} parent=0 // pred_check_branch
    %13 = sbr.rel (0) target = $region9
  $region8: #{lyapunov_general_forward.1} parent=0 // pred_region
    _
  $region9: #{lyapunov_general_forward.1} parent=0 // pred_fallthru
    _
  // Predicated region
  $region10: #{lyapunov_general_forward.1} parent=0 // pred_check
    _
  $region11: #{lyapunov_general_forward.1} parent=0 // pred_check_branch
    %15 = sbr.rel (0) target = $region13
  $region12: #{lyapunov_general_forward.1} parent=0 // pred_region
    _
  $region13: #{lyapunov_general_forward.1} parent=0 // pred_fallthru
    _
  // Predicated region
  $region14: #{lyapunov_general_forward.1} parent=0 // pred_check
    _
  $region15: #{lyapunov_general_forward.1} parent=0 // pred_check_branch
    %17 = sbr.rel (0) target = $region17
  $region16: #{lyapunov_general_forward.1} parent=0 // pred_region
    _
  $region17: #{lyapunov_general_forward.1} parent=0 // pred_fallthru
    _
  // Predicated region
  $region18: #{lyapunov_general_forward.1} parent=0 // pred_check
    _
  $region19: #{lyapunov_general_forward.1} parent=0 // pred_check_branch
    %19 = sbr.rel (0) target = $region21
  $region20: #{lyapunov_general_forward.1} parent=0 // pred_region
    _
  $region21: #{lyapunov_general_forward.1} parent=0 // pred_fallthru
    _
  %v20 = vld [vmem:[%s1] sm:$0xff]
  %v21 = vld [vmem:[%s1 + $0x8] sm:$0xff]
  %v22 = vld [vmem:[%s1 + $0x10] sm:$0xff]
  %v23 = vld [vmem:[%s1 + $0x18] sm:$0xff]
  %v24 = vld [vmem:[%s1 + $0x20] sm:$0x3]
  %v25 = vld [vmem:[%s0] sm:$0xff]
  %v26 = vld [vmem:[%s0 + $0x8] sm:$0xff]
  %v27 = vld [vmem:[%s0 + $0x10] sm:$0xff]
  %v28 = vld [vmem:[%s0 + $0x18] sm:$0xff]
  %v29 = vld [vmem:[%s0 + $0x20] sm:$0xff]
  %v30 = vld [vmem:[%s0 + $0x28] sm:$0xff]
  %v31 = vld [vmem:[%s0 + $0x30] sm:$0xff]
  %v32 = vld [vmem:[%s0 + $0x38] sm:$0xff]
  %v33 = vld [vmem:[%s0 + $0x40] sm:$0xff]
  %v34 = vld [vmem:[%s0 + $0x48] sm:$0xff]
  %v35 = vld [vmem:[%s0 + $0x50] sm:$0xff]
  %v36 = vld [vmem:[%s0 + $0x58] sm:$0xff]
  %v37 = vld [vmem:[%s0 + $0x60] sm:$0xff]
  %v38 = vld [vmem:[%s0 + $0x68] sm:$0xff]
  %v39 = vld [vmem:[%s0 + $0x70] sm:$0xff]
  %v40 = vld [vmem:[%s0 + $0x78] sm:$0xff]
  %v41 = vld [vmem:[%s2] sm:$0xff]
  %v42 = vld [vmem:[%s2 + $0x8] sm:$0xff]
  %v43 = vld [vmem:[%s2 + $0x10] sm:$0xff]
  %v44 = vld [vmem:[%s2 + $0x18] sm:$0xff]
  %v45 = vld [vmem:[%s2 + $0x20] sm:$0x3]
  %47 = vset.pattern.permute.xlu0 0
  %48 = vperm.xlu0 %47, %v41
  %v49 = vpop.permute.xlu0 %48
  %52 = vset.pattern.permute.xlu0 0
  %53 = vperm.xlu0 %52, %v42
  %v54 = vpop.permute.xlu0 %53
  %57 = vset.pattern.permute.xlu0 0
  %58 = vperm.xlu0 %57, %v43
  %v59 = vpop.permute.xlu0 %58
  %62 = vset.pattern.permute.xlu0 0
  %63 = vperm.xlu0 %62, %v44
  %v64 = vpop.permute.xlu0 %63
  %67 = vset.pattern.permute.xlu0 0
  %68 = vperm.xlu0 %67, %v45
  %v69 = vpop.permute.xlu0 %68
  %vm71 = vcmask 15360
  %v73 = vsel %vm71, %v20, 0
  %v76 = vsel %vm71, %v21, 0
  %v79 = vsel %vm71, %v22, 0
  %v82 = vsel %vm71, %v23, 0
  %v85 = vsel %vm71, %v24, 0
  %v88 = vsel %vm71, %v25, 0
  %v91 = vsel %vm71, %v26, 0
  %v94 = vsel %vm71, %v27, 0
  %v97 = vsel %vm71, %v28, 0
  %v100 = vsel %vm71, %v29, 0
  %v103 = vsel %vm71, %v30, 0
  %v106 = vsel %vm71, %v31, 0
  %v109 = vsel %vm71, %v32, 0
  %v112 = vsel %vm71, %v33, 0
  %v115 = vsel %vm71, %v34, 0
  %v118 = vsel %vm71, %v35, 0
  %v121 = vsel %vm71, %v36, 0
  %v124 = vsel %vm71, %v37, 0
  %v127 = vsel %vm71, %v38, 0
  %v130 = vsel %vm71, %v39, 0
  %v133 = vsel %vm71, %v40, 0
  %135 = vmatprep.subr.mxu0 0.0
  %136 = vmatpush1.xpose.msra.mxu0 %v88
  %137 = vmatprep.subr.mxu0 0.0
  %138 = vmatpush1.xpose.msra.mxu0 %v91
  %139 = vmatprep.subr.mxu0 0.0
  %140 = vmatpush1.xpose.msra.mxu0 %v94
  %141 = vmatprep.subr.mxu0 0.0
  %142 = vmatpush1.xpose.msra.mxu0 %v97
  %143 = vmatprep.subr.mxu0 0.0
  %144 = vmatpush1.xpose.msra.mxu0 %v100
  %145 = vmatprep.subr.mxu0 0.0
  %146 = vmatpush1.xpose.msra.mxu0 %v103
  %147 = vmatprep.subr.mxu0 0.0
  %148 = vmatpush1.xpose.msra.mxu0 %v106
  %149 = vmatprep.subr.mxu0 0.0
  %150 = vmatpush1.xpose.msra.mxu0 %v109
  %151 = vmatprep.subr.mxu0 0.0
  %152 = vmatpush1.xpose.msra.mxu0 %v112
  %153 = vmatprep.subr.mxu0 0.0
  %154 = vmatpush1.xpose.msra.mxu0 %v115
  %155 = vmatprep.subr.mxu0 0.0
  %156 = vmatpush1.xpose.msra.mxu0 %v118
  %157 = vmatprep.subr.mxu0 0.0
  %158 = vmatpush1.xpose.msra.mxu0 %v121
  %159 = vmatprep.subr.mxu0 0.0
  %160 = vmatpush1.xpose.msra.mxu0 %v124
  %161 = vmatprep.subr.mxu0 0.0
  %162 = vmatpush1.xpose.msra.mxu0 %v127
  %163 = vmatprep.subr.mxu0 0.0
  %164 = vmatpush1.xpose.msra.mxu0 %v130
  %165 = vmatprep.subr.mxu0 0.0
  %166 = vmatpush1.xpose.msra.mxu0 %v133
  %167 = vmatprep.subr.mxu0 0.0
  %168 = vmatpush1.xpose.msra.mxu0 0.0
  %169 = vmatprep.subr.mxu0 0.0
  %170 = vmatpush1.xpose.msra.mxu0 0.0
  %171 = vmatprep.subr.mxu0 0.0
  %172 = vmatpush1.xpose.msra.mxu0 0.0
  %173 = vmatprep.subr.mxu0 0.0
  %174 = vmatpush1.xpose.msra.mxu0 0.0
  %175 = vmatprep.subr.mxu0 0.0
  %176 = vmatpush1.xpose.msra.mxu0 0.0
  %177 = vmatprep.subr.mxu0 0.0
  %178 = vmatpush1.xpose.msra.mxu0 0.0
  %179 = vmatprep.subr.mxu0 0.0
  %180 = vmatpush1.xpose.msra.mxu0 0.0
  %181 = vmatprep.subr.mxu0 0.0
  %182 = vmatpush1.xpose.msra.mxu0 0.0
  %183 = vmatprep.subr.mxu0 0.0
  %184 = vmatpush1.xpose.msra.mxu0 0.0
  %185 = vmatprep.subr.mxu0 0.0
  %186 = vmatpush1.xpose.msra.mxu0 0.0
  %187 = vmatprep.subr.mxu0 0.0
  %188 = vmatpush1.xpose.msra.mxu0 0.0
  %189 = vmatprep.subr.mxu0 0.0
  %190 = vmatpush1.xpose.msra.mxu0 0.0
  %191 = vmatprep.subr.mxu0 0.0
  %192 = vmatpush1.xpose.msra.mxu0 0.0
  %193 = vmatprep.subr.mxu0 0.0
  %194 = vmatpush1.xpose.msra.mxu0 0.0
  %195 = vmatprep.subr.mxu0 0.0
  %196 = vmatpush1.xpose.msra.mxu0 0.0
  %197 = vmatprep.subr.mxu0 0.0
  %198 = vmatpush1.xpose.msra.mxu0 0.0
  %199 = vmatprep.mubr.f32.mxu0 0.0
  %200 = vmatmul.mubr.f32.gmra.mrb[0].mxu0 %v73
  %v201 = vpop.f32.mrb[0].mxu0
  %v202 = vadd.f32 %v49, %v201
  %v203 = vpop.f32.mrb[0].mxu0
  %204 = vmatprep.mubr.f32.mxu0 0.0
  %205 = vmatmul.mubr.f32.gmra.mrb[0].mxu0 %v76
  %v206 = vpop.f32.mrb[0].mxu0
  %v207 = vadd.f32 %v54, %v206
  %v208 = vpop.f32.mrb[0].mxu0
  %209 = vmatprep.mubr.f32.mxu0 0.0
  %210 = vmatmul.mubr.f32.gmra.mrb[0].mxu0 %v79
  %v211 = vpop.f32.mrb[0].mxu0
  %v212 = vadd.f32 %v59, %v211
  %v213 = vpop.f32.mrb[0].mxu0
  %214 = vmatprep.mubr.f32.mxu0 0.0
  %215 = vmatmul.mubr.f32.gmra.mrb[0].mxu0 %v82
  %v216 = vpop.f32.mrb[0].mxu0
  %v217 = vadd.f32 %v64, %v216
  %v218 = vpop.f32.mrb[0].mxu0
  %219 = vmatprep.mubr.f32.mxu0 0.0
  %220 = vmatmul.mubr.f32.gmra.mrb[0].mxu0 %v85
  %v221 = vpop.f32.mrb[0].mxu0
  %v222 = vadd.f32 %v69, %v221
  %v223 = vpop.f32.mrb[0].mxu0
  %224 = vdwg.mxu0
  %v225 = vmul.f32 %v222, %v222
  %v227 = vrot.slane %v225, 1
  %v229 = vadd.f32 %v225, %v227
  %v230 = vtanh.pop %v202
  %v231 = vtanh.pop %v207
  %v232 = vtanh.pop %v212
  %v233 = vtanh.pop %v217
  %v234 = vld [vmem:[%s3] sm:$0xff]
  %v235 = vld [vmem:[%s3 + $0x8] sm:$0xff]
  %v236 = vld [vmem:[%s3 + $0x10] sm:$0xff]
  %v237 = vld [vmem:[%s3 + $0x18] sm:$0xff]
  %vm238 = vcmask 261120
  %v240 = vsel %vm238, %v234, 0
  %v243 = vsel %vm238, %v235, 0
  %v246 = vsel %vm238, %v236, 0
  %v249 = vsel %vm238, %v237, 0
  %251 = vmatprep.subr.mxu0 0.0
  %252 = vmatpush1.msra.mxu0 %v230
  %253 = vmatprep.subr.mxu0 0.0
  %254 = vmatpush1.msra.mxu0 %v231
  %255 = vmatprep.subr.mxu0 0.0
  %256 = vmatpush1.msra.mxu0 %v232
  %257 = vmatprep.subr.mxu0 0.0
  %258 = vmatpush1.msra.mxu0 %v233
  %259 = vmatprep.subr.mxu0 0.0
  %260 = vmatpush1.msra.mxu0 0.0
  %261 = vmatprep.subr.mxu0 0.0
  %262 = vmatpush1.msra.mxu0 0.0
  %263 = vmatprep.subr.mxu0 0.0
  %264 = vmatpush1.msra.mxu0 0.0
  %265 = vmatprep.subr.mxu0 0.0
  %266 = vmatpush1.msra.mxu0 0.0
  %267 = vmatprep.subr.mxu0 0.0
  %268 = vmatpush1.msra.mxu0 0.0
  %269 = vmatprep.subr.mxu0 0.0
  %270 = vmatpush1.msra.mxu0 0.0
  %271 = vmatprep.subr.mxu0 0.0
  %272 = vmatpush1.msra.mxu0 0.0
  %273 = vmatprep.subr.mxu0 0.0
  %274 = vmatpush1.msra.mxu0 0.0
  %275 = vmatprep.subr.mxu0 0.0
  %276 = vmatpush1.msra.mxu0 0.0
  %277 = vmatprep.subr.mxu0 0.0
  %278 = vmatpush1.msra.mxu0 0.0
  %279 = vmatprep.subr.mxu0 0.0
  %280 = vmatpush1.msra.mxu0 0.0
  %281 = vmatprep.subr.mxu0 0.0
  %282 = vmatpush1.msra.mxu0 0.0
  %283 = vmatprep.subr.mxu0 0.0
  %284 = vmatpush1.msra.mxu0 0.0
  %285 = vmatprep.subr.mxu0 0.0
  %286 = vmatpush1.msra.mxu0 0.0
  %287 = vmatprep.subr.mxu0 0.0
  %288 = vmatpush1.msra.mxu0 0.0
  %289 = vmatprep.subr.mxu0 0.0
  %290 = vmatpush1.msra.mxu0 0.0
  %291 = vmatprep.subr.mxu0 0.0
  %292 = vmatpush1.msra.mxu0 0.0
  %293 = vmatprep.subr.mxu0 0.0
  %294 = vmatpush1.msra.mxu0 0.0
  %295 = vmatprep.subr.mxu0 0.0
  %296 = vmatpush1.msra.mxu0 0.0
  %297 = vmatprep.subr.mxu0 0.0
  %298 = vmatpush1.msra.mxu0 0.0
  %299 = vmatprep.subr.mxu0 0.0
  %300 = vmatpush1.msra.mxu0 0.0
  %301 = vmatprep.subr.mxu0 0.0
  %302 = vmatpush1.msra.mxu0 0.0
  %303 = vmatprep.subr.mxu0 0.0
  %304 = vmatpush1.msra.mxu0 0.0
  %305 = vmatprep.subr.mxu0 0.0
  %306 = vmatpush1.msra.mxu0 0.0
  %307 = vmatprep.subr.mxu0 0.0
  %308 = vmatpush1.msra.mxu0 0.0
  %309 = vmatprep.subr.mxu0 0.0
  %310 = vmatpush1.msra.mxu0 0.0
  %311 = vmatprep.subr.mxu0 0.0
  %312 = vmatpush1.msra.mxu0 0.0
  %313 = vmatprep.subr.mxu0 0.0
  %314 = vmatpush1.msra.mxu0 0.0
  %315 = vmatprep.mubr.f32.mxu0 0.0
  %316 = vmatmul.mubr.f32.gmra.mrb[0].mxu0 %v240
  %v317 = vpop.f32.mrb[0].mxu0
  %v318 = vadd.f32 0.0, %v317
  %v319 = vpop.f32.mrb[0].mxu0
  %320 = vmatprep.mubr.f32.mxu0 0.0
  %321 = vmatmul.mubr.f32.gmra.mrb[0].mxu0 %v243
  %v322 = vpop.f32.mrb[0].mxu0
  %v323 = vadd.f32 0.0, %v322
  %v324 = vpop.f32.mrb[0].mxu0
  %325 = vmatprep.mubr.f32.mxu0 0.0
  %326 = vmatmul.mubr.f32.gmra.mrb[0].mxu0 %v246
  %v327 = vpop.f32.mrb[0].mxu0
  %v328 = vadd.f32 0.0, %v327
  %v329 = vpop.f32.mrb[0].mxu0
  %330 = vmatprep.mubr.f32.mxu0 0.0
  %331 = vmatmul.mubr.f32.gmra.mrb[0].mxu0 %v249
  %v332 = vpop.f32.mrb[0].mxu0
  %v333 = vadd.f32 0.0, %v332
  %v334 = vpop.f32.mrb[0].mxu0
  %335 = vdwg.mxu0
  %v336 = vtanh.pop %v318
  %v337 = vtanh.pop %v323
  %v338 = vtanh.pop %v328
  %v339 = vtanh.pop %v333
  %v340 = vld [vmem:[%s4] sm:$0x1]
  %v342 = vsel %vm238, %v340, 0
  %344 = vmatprep.subr.mxu0 0.0
  %345 = vmatpush1.msra.mxu0 %v336
  %346 = vmatprep.subr.mxu0 0.0
  %347 = vmatpush1.msra.mxu0 %v337
  %348 = vmatprep.subr.mxu0 0.0
  %349 = vmatpush1.msra.mxu0 %v338
  %350 = vmatprep.subr.mxu0 0.0
  %351 = vmatpush1.msra.mxu0 %v339
  %352 = vmatprep.subr.mxu0 0.0
  %353 = vmatpush1.msra.mxu0 0.0
  %354 = vmatprep.subr.mxu0 0.0
  %355 = vmatpush1.msra.mxu0 0.0
  %356 = vmatprep.subr.mxu0 0.0
  %357 = vmatpush1.msra.mxu0 0.0
  %358 = vmatprep.subr.mxu0 0.0
  %359 = vmatpush1.msra.mxu0 0.0
  %360 = vmatprep.subr.mxu0 0.0
  %361 = vmatpush1.msra.mxu0 0.0
  %362 = vmatprep.subr.mxu0 0.0
  %363 = vmatpush1.msra.mxu0 0.0
  %364 = vmatprep.subr.mxu0 0.0
  %365 = vmatpush1.msra.mxu0 0.0
  %366 = vmatprep.subr.mxu0 0.0
  %367 = vmatpush1.msra.mxu0 0.0
  %368 = vmatprep.subr.mxu0 0.0
  %369 = vmatpush1.msra.mxu0 0.0
  %370 = vmatprep.subr.mxu0 0.0
  %371 = vmatpush1.msra.mxu0 0.0
  %372 = vmatprep.subr.mxu0 0.0
  %373 = vmatpush1.msra.mxu0 0.0
  %374 = vmatprep.subr.mxu0 0.0
  %375 = vmatpush1.msra.mxu0 0.0
  %376 = vmatprep.subr.mxu0 0.0
  %377 = vmatpush1.msra.mxu0 0.0
  %378 = vmatprep.subr.mxu0 0.0
  %379 = vmatpush1.msra.mxu0 0.0
  %380 = vmatprep.subr.mxu0 0.0
  %381 = vmatpush1.msra.mxu0 0.0
  %382 = vmatprep.subr.mxu0 0.0
  %383 = vmatpush1.msra.mxu0 0.0
  %384 = vmatprep.subr.mxu0 0.0
  %385 = vmatpush1.msra.mxu0 0.0
  %386 = vmatprep.subr.mxu0 0.0
  %387 = vmatpush1.msra.mxu0 0.0
  %388 = vmatprep.subr.mxu0 0.0
  %389 = vmatpush1.msra.mxu0 0.0
  %390 = vmatprep.subr.mxu0 0.0
  %391 = vmatpush1.msra.mxu0 0.0
  %392 = vmatprep.subr.mxu0 0.0
  %393 = vmatpush1.msra.mxu0 0.0
  %394 = vmatprep.subr.mxu0 0.0
  %395 = vmatpush1.msra.mxu0 0.0
  %396 = vmatprep.subr.mxu0 0.0
  %397 = vmatpush1.msra.mxu0 0.0
  %398 = vmatprep.subr.mxu0 0.0
  %399 = vmatpush1.msra.mxu0 0.0
  %400 = vmatprep.subr.mxu0 0.0
  %401 = vmatpush1.msra.mxu0 0.0
  %402 = vmatprep.subr.mxu0 0.0
  %403 = vmatpush1.msra.mxu0 0.0
  %404 = vmatprep.subr.mxu0 0.0
  %405 = vmatpush1.msra.mxu0 0.0
  %406 = vmatprep.subr.mxu0 0.0
  %407 = vmatpush1.msra.mxu0 0.0
  %408 = vmatprep.mubr.f32.mxu0 0.0
  %409 = vmatmul.mubr.f32.gmra.mrb[0].mxu0 %v342
  %v410 = vpop.f32.mrb[0].mxu0
  %v411 = vadd.f32 0.0, %v410
  %v412 = vpop.f32.mrb[0].mxu0
  %413 = vdwg.mxu0
  %v414 = vmul.f32 %v411, %v411
  %v415 = vmul.f32 %v229, 0.1
  %v416 = vadd.f32 %v414, %v415
  %417 = vst [vmem:[%s5] sm:$0x1] %v416
  // Predicated region
  $region22: #{lyapunov_general_forward.1} parent=0 // pred_check
    _
  $region23: #{lyapunov_general_forward.1} parent=0 // pred_check_branch
    %419 = sbr.rel (0) target = $region25
  $region24: #{lyapunov_general_forward.1} parent=0 // pred_region
    _
  $region25: #{lyapunov_general_forward.1} parent=0 // pred_fallthru
    _
  // Predicated region
  $region26: #{lyapunov_general_forward.1} parent=0 // pred_check
    _
  $region27: #{lyapunov_general_forward.1} parent=0 // pred_check_branch
    %421 = sbr.rel (0) target = $region29
  $region28: #{lyapunov_general_forward.1} parent=0 // pred_region
    _
  $region29: #{lyapunov_general_forward.1} parent=0 // pred_fallthru
    _

</llo_original>
